<compile_context>
chip_gen: v6e
topology: v6e:2x2x1
jax: 0.10.0
libtpu: 0.0.40
codegen_flags: <defaults>
</compile_context>

<pallas_src>
import functools

import jax
import jax.numpy as jnp
from jax.experimental import pallas as pl
from jax.experimental.pallas import tpu as pltpu


def _lif_conv_bn_kernel(x_ref, w_ref, b_ref, o_ref, *, vth_tau, K, pad, H):
    """Fused LIF -> Conv2d -> BatchNorm(eval) on one VMEM-resident row block.

    x_ref: (rows, W*C_in)          unpadded NHWC activation rows (rows = nt*H)
    w_ref: (K*W*C_in, W*C_out)     bf16 block-Toeplitz conv weights, BN scale folded in
    b_ref: (1, W*C_out)            f32 folded BN bias
    o_ref: (rows, W*C_out)         f32 lane-dense output slab
    """
    rows = x_ref.shape[0]

    # LIF fire from rest: heaviside(x/tau - v_th) == (x >= v_th*tau) for tau > 0.
    # One VPU compare, no full-tensor multiply.
    spike = (x_ref[...] >= vth_tau).astype(jnp.float32)              # (rows, W*C_in)

    # Row index within each image (row r = n*H + h). Used to zero the kh taps that would
    # read past the top/bottom image edge -- this *is* Conv2d's zero padding of the spikes.
    h_idx = jax.lax.broadcasted_iota(jnp.int32, spike.shape, 0) % H

    segs = []
    for kh in range(K):
        d = kh - pad                                                  # this tap reads image row h + d
        if d == 0:
            seg = spike
        else:
            # Sublane rotate (XLU slot, overlaps the MXU). Wrapped rows (block edge /
            # neighbouring image) land only where the mask zeroes them.
            seg = pltpu.roll(spike, shift=(-d) % rows, axis=0)
            if d < 0:
                seg = jnp.where(h_idx < -d, 0.0, seg)                 # image row h + d < 0
            else:
                seg = jnp.where(h_idx >= H - d, 0.0, seg)             # image row h + d >= H
        segs.append(seg)

    # One MXU contraction: (rows, K*W*C_in) x (K*W*C_in, W*C_out), bf16 operands, f32 accumulate.
    lhs = jnp.concatenate(segs, axis=-1).astype(jnp.bfloat16)
    acc = jnp.dot(lhs, w_ref[...], preferred_element_type=jnp.float32)

    # Folded BN bias; lane-dense (multiple-of-128-wide) unmasked store.
    o_ref[...] = (acc + b_ref[...]).astype(o_ref.dtype)


def make_lif_conv_bn_params(weight_oihw, gamma, beta, running_mean, running_var,
                            *, tau, threshold, padding, width, eps=1e-5):
    """Fold BN (eval) into the conv weights and build the W-block-Toeplitz slab.

    Depends only on weights / BN stats -> compute once per weight update, NOT per forward call.
    """
    C_out, C_in, K, Kw = weight_oihw.shape
    assert K == Kw, "square kernels only"
    assert float(tau) > 0.0, "LIF fold (x >= threshold*tau) assumes tau > 0"
    W, p = int(width), int(padding)

    inv = gamma / jnp.sqrt(running_var + eps)                         # (C_out,)
    w_hwio = jnp.transpose(weight_oihw, (2, 3, 1, 0))                 # (K, K, C_in, C_out)
    w_scaled = w_hwio * inv[None, None, None, :]                      # BN scale folded in

    # slab[kh, w_in*C_in+ci, w_out*C_out+co] = w_scaled[kh, w_in-w_out+p, ci, co] if valid else 0.
    # Out-of-range W taps are zero rows -> the conv's W zero-padding lives in the RHS and the
    # activations never need a padded copy.
    sel = (jnp.arange(W)[None, :, None] - jnp.arange(W)[None, None, :] + p
           == jnp.arange(K)[:, None, None]).astype(w_scaled.dtype)    # (K, W_in, W_out)
    w_slab = jnp.einsum("hkic,kab->haibc", w_scaled, sel)             # (K, W, C_in, W, C_out)
    w_slab = w_slab.reshape(K * W * C_in, W * C_out).astype(jnp.bfloat16)

    bias = beta - running_mean * inv                                  # (C_out,)
    bias_slab = jnp.tile(bias, W).reshape(1, W * C_out).astype(jnp.float32)

    # TODO(synk): at real channel counts (C_in >~ 32) drop the W-Toeplitz slab (it replicates
    # weights ~W-fold and inflates MXU FLOPs ~W/K-fold) and switch to K*K per-tap
    # (rows, C_in) x (C_in, C_out_tile) dots, tiling W*C_out via BlockSpec so the slab tile
    # fits v7x's 64 MiB VMEM; set vmem_limit_bytes explicitly when block sizes are raised.
    return dict(w_slab=w_slab, bias_slab=bias_slab,
                vth_tau=float(threshold) * float(tau),
                kernel_size=int(K), padding=p, c_out=int(C_out))


@functools.partial(jax.jit, static_argnames=("vth_tau", "kernel_size", "padding",
                                             "c_out", "target_rows"))
def lif_conv_bn_apply(x_nchw, w_slab, bias_slab, *, vth_tau, kernel_size, padding,
                      c_out, target_rows=512):
    """x_nchw: (N, C_in, H, W) float32.  Returns (N, C_out, H, W) float32."""
    N, C_in, H, W = x_nchw.shape
    K, p = kernel_size, padding
    WC_in, WC_out = W * C_in, W * c_out

    # NCHW -> (N*H, W*C_in) activation row slab.
    # TODO(synk): when stacking layers / SNN timesteps, keep activations in this row-slab
    # layout end-to-end (and fold T into the row dim) instead of round-tripping through
    # NCHW -- saves two activation-sized HBM passes per layer and amortizes launch overhead.
    x2d = jnp.transpose(x_nchw, (0, 2, 3, 1)).reshape(N * H, WC_in)

    # Batch tile: largest whole-image tile (<= target_rows rows) dividing N, so the MXU row
    # dimension is well filled and per-grid-step overhead is amortized. For the toy size this
    # collapses to a single grid step.
    nt = max(1, min(N, max(1, target_rows // H)))
    while N % nt:
        nt -= 1
    if (nt * H) % 8 and nt != N:        # keep the block's sublane dim 8-aligned
        nt = N
    rows_blk = nt * H
    grid = (N // nt,)

    kernel = functools.partial(_lif_conv_bn_kernel, vth_tau=vth_tau, K=K, pad=p, H=H)

    out2d = pl.pallas_call(
        kernel,
        out_shape=jax.ShapeDtypeStruct((N * H, WC_out), jnp.float32),
        grid_spec=pltpu.PrefetchScalarGridSpec(
            num_scalar_prefetch=0,
            grid=grid,
            in_specs=[
                # streaming activation row tiles (default double-buffered pipeline)
                pl.BlockSpec((rows_blk, WC_in), lambda b: (b, 0)),
                # weight slab / bias: index_map ignores the grid index -> DMA'd once,
                # stays VMEM-resident across all row tiles
                pl.BlockSpec((K * WC_in, WC_out), lambda b: (0, 0)),
                pl.BlockSpec((1, WC_out), lambda b: (0, 0)),
            ],
            out_specs=pl.BlockSpec((rows_blk, WC_out), lambda b: (b, 0)),
        ),
        compiler_params=pltpu.CompilerParams(
            dimension_semantics=("parallel",)),   # row tiles independent -> both TCs on v7x
    )(x2d, w_slab, bias_slab)

    return jnp.transpose(out2d.reshape(N, H, W, c_out), (0, 3, 1, 2))  # back to NCHW


def _reference(x_nchw, weight_oihw, gamma, beta, running_mean, running_var,
               *, tau, threshold, padding, eps=1e-5):
    spike = (x_nchw / tau >= threshold).astype(jnp.float32)
    conv = jax.lax.conv_general_dilated(
        spike, weight_oihw, window_strides=(1, 1),
        padding=((padding, padding), (padding, padding)),
        dimension_numbers=("NCHW", "OIHW", "NCHW"))
    inv = gamma / jnp.sqrt(running_var + eps)
    return conv * inv[None, :, None, None] + (beta - running_mean * inv)[None, :, None, None]


if __name__ == "__main__":
    # Hyperparameters implied by the module's __init__ (args.threshold, args.tau, ...)
    N, C_in, C_out, H, W = 2, 4, 8, 16, 16
    K, padding = 3, 1
    tau, threshold = 2.0, 1.0

    key = jax.random.PRNGKey(0)
    kx, kw, kg, kb, km, kv = jax.random.split(key, 6)

    x = jax.random.normal(kx, (N, C_in, H, W), dtype=jnp.float32) * 3.0
    weight = jax.random.normal(kw, (C_out, C_in, K, K), dtype=jnp.float32) * 0.1
    gamma = 1.0 + 0.1 * jax.random.normal(kg, (C_out,), dtype=jnp.float32)
    beta = 0.05 * jax.random.normal(kb, (C_out,), dtype=jnp.float32)
    running_mean = 0.1 * jax.random.normal(km, (C_out,), dtype=jnp.float32)
    running_var = jax.random.uniform(kv, (C_out,), dtype=jnp.float32,
                                     minval=0.5, maxval=1.5)

    # Built once per weight update (hoisted off the per-forward hot path).
    params = make_lif_conv_bn_params(weight, gamma, beta, running_mean, running_var,
                                     tau=tau, threshold=threshold, padding=padding, width=W)

    out = lif_conv_bn_apply(x, params["w_slab"], params["bias_slab"],
                            vth_tau=params["vth_tau"],
                            kernel_size=params["kernel_size"],
                            padding=params["padding"],
                            c_out=params["c_out"])
    out = jax.block_until_ready(out)

    ref = _reference(x, weight, gamma, beta, running_mean, running_var,
                     tau=tau, threshold=threshold, padding=padding)
    assert out.shape == (N, C_out, H, W)
    # bf16 weight operands -> loosened tolerance (spike side is exact in bf16).
    assert jnp.allclose(out, ref, atol=2e-2, rtol=2e-2), "mismatch vs reference"

    print("KERNEL_OK")
</pallas_src>

<mosaic_0001>
module attributes {stable_mosaic.version = 11 : i64} {
  func.func @_lif_conv_bn_kernel(%arg0: i32, %arg1: memref<32x64xf32, #tpu.memory_space<vmem>>, %arg2: memref<192x128xbf16, #tpu.memory_space<vmem>>, %arg3: memref<1x128xf32, #tpu.memory_space<vmem>>, %arg4: memref<32x128xf32, #tpu.memory_space<vmem>>) attributes {dimension_semantics = [#tpu.dimension_semantics<parallel>], iteration_bounds = array<i64: 1>, scalar_prefetch = 0 : i64, scratch_operands = 0 : i64, tpu.core_type = #tpu.core_type<tc>, window_params = [{transform_indices = @transform_0, window_bounds = array<i64: 32, 64>}, {pipeline_mode = #tpu.pipeline_mode<synchronous>, transform_indices = @transform_1, window_bounds = array<i64: 192, 128>}, {pipeline_mode = #tpu.pipeline_mode<synchronous>, transform_indices = @transform_2, window_bounds = array<i64: 1, 128>}, {transform_indices = @transform_3, window_bounds = array<i64: 32, 128>}]} {
    %c0 = arith.constant 0 : index
    %c0_0 = arith.constant 0 : index
    %0 = vector.load %arg1[%c0, %c0_0] : memref<32x64xf32, #tpu.memory_space<vmem>>, vector<32x64xf32>
    %cst = arith.constant 2.000000e+00 : f32
    %1 = vector.broadcast %cst : f32 to vector<32x64xf32>
    %2 = arith.cmpf oge, %0, %1 : vector<32x64xf32>
    %3 = arith.extui %2 : vector<32x64xi1> to vector<32x64xi32>
    %4 = arith.sitofp %3 : vector<32x64xi32> to vector<32x64xf32>
    %5 = tpu.iota {dimensions = array<i32: 0>} : vector<32x64xi32>
    %c16_i32 = arith.constant 16 : i32
    %c0_i32 = arith.constant 0 : i32
    %6 = arith.cmpi eq, %c16_i32, %c0_i32 : i32
    %c1_i32 = arith.constant 1 : i32
    %7 = arith.select %6, %c1_i32, %c16_i32 : i32
    %8 = vector.broadcast %7 : i32 to vector<32x64xi32>
    %9 = arith.remsi %5, %8 : vector<32x64xi32>
    %c0_i32_1 = arith.constant 0 : i32
    %10 = vector.broadcast %c0_i32_1 : i32 to vector<32x64xi32>
    %11 = arith.cmpi ne, %9, %10 : vector<32x64xi32>
    %c0_i32_2 = arith.constant 0 : i32
    %12 = vector.broadcast %c0_i32_2 : i32 to vector<32x64xi32>
    %13 = arith.cmpi slt, %9, %12 : vector<32x64xi32>
    %c0_i32_3 = arith.constant 0 : i32
    %14 = arith.cmpi slt, %7, %c0_i32_3 : i32
    %15 = vector.broadcast %14 : i1 to vector<32x64xi1>
    %16 = vector.broadcast %15 : vector<32x64xi1> to vector<32x64xi1>
    %17 = arith.xori %13, %16 : vector<32x64xi1>
    %18 = arith.andi %17, %11 : vector<32x64xi1>
    %19 = vector.broadcast %7 : i32 to vector<32x64xi32>
    %20 = arith.addi %9, %19 : vector<32x64xi32>
    %21 = arith.select %18, %20, %9 : vector<32x64xi1>, vector<32x64xi32>
    %c1_i32_4 = arith.constant 1 : i32
    %22 = tpu.dynamic_rotate %4 by %c1_i32_4 dim 0 : vector<32x64xf32>, i32 -> vector<32x64xf32>
    %c1_i32_5 = arith.constant 1 : i32
    %23 = vector.broadcast %c1_i32_5 : i32 to vector<32x64xi32>
    %24 = arith.cmpi slt, %21, %23 : vector<32x64xi32>
    %cst_6 = arith.constant 0.000000e+00 : f32
    %25 = vector.broadcast %cst_6 : f32 to vector<32x64xf32>
    %26 = arith.select %24, %25, %22 : vector<32x64xi1>, vector<32x64xf32>
    %c31_i32 = arith.constant 31 : i32
    %27 = tpu.dynamic_rotate %4 by %c31_i32 dim 0 : vector<32x64xf32>, i32 -> vector<32x64xf32>
    %c15_i32 = arith.constant 15 : i32
    %28 = vector.broadcast %c15_i32 : i32 to vector<32x64xi32>
    %29 = arith.cmpi sge, %21, %28 : vector<32x64xi32>
    %cst_7 = arith.constant 0.000000e+00 : f32
    %30 = vector.broadcast %cst_7 : f32 to vector<32x64xf32>
    %31 = arith.select %29, %30, %27 : vector<32x64xi1>, vector<32x64xf32>
    %32 = tpu.concatenate %26, %4, %31 in 1 : vector<32x64xf32>, vector<32x64xf32>, vector<32x64xf32> -> vector<32x192xf32>
    %33 = arith.truncf %32 : vector<32x192xf32> to vector<32x192xbf16>
    %c0_8 = arith.constant 0 : index
    %c0_9 = arith.constant 0 : index
    %34 = vector.load %arg2[%c0_8, %c0_9] : memref<192x128xbf16, #tpu.memory_space<vmem>>, vector<192x128xbf16>
    %cst_10 = arith.constant dense<0.000000e+00> : vector<32x128xf32>
    %35 = tpu.matmul %33, %34, %cst_10 {dimension_numbers = #tpu.dot_dimension_numbers<[1], [0], [0], [1], [0, 0, 1, 1], [], []>} : vector<32x192xbf16>, vector<192x128xbf16>, vector<32x128xf32> -> vector<32x128xf32>
    %c0_11 = arith.constant 0 : index
    %c0_12 = arith.constant 0 : index
    %36 = vector.load %arg3[%c0_11, %c0_12] : memref<1x128xf32, #tpu.memory_space<vmem>>, vector<1x128xf32>
    %37 = vector.broadcast %36 : vector<1x128xf32> to vector<32x128xf32>
    %38 = arith.addf %35, %37 : vector<32x128xf32>
    %c0_13 = arith.constant 0 : index
    %c0_14 = arith.constant 0 : index
    %39 = vector.load %arg4[%c0_13, %c0_14] : memref<32x128xf32, #tpu.memory_space<vmem>>, vector<32x128xf32>
    tpu.vector_store %arg4[%c0_13, %c0_14], %38 {strides = array<i32>} : memref<32x128xf32, #tpu.memory_space<vmem>>, vector<32x128xf32>,
    return
  }
  func.func @transform_0(%arg0: i32) -> (i32, i32) {
    %c0_i32 = arith.constant 0 : i32
    %c0_i32_0 = arith.constant 0 : i32
    return %arg0, %c0_i32 : i32, i32
  }
  func.func @transform_1(%arg0: i32) -> (i32, i32) {
    %c0_i32 = arith.constant 0 : i32
    %c0_i32_0 = arith.constant 0 : i32
    %c0_i32_1 = arith.constant 0 : i32
    return %c0_i32, %c0_i32_0 : i32, i32
  }
  func.func @transform_2(%arg0: i32) -> (i32, i32) {
    %c0_i32 = arith.constant 0 : i32
    %c0_i32_0 = arith.constant 0 : i32
    %c0_i32_1 = arith.constant 0 : i32
    return %c0_i32, %c0_i32_0 : i32, i32
  }
  func.func @transform_3(%arg0: i32) -> (i32, i32) {
    %c0_i32 = arith.constant 0 : i32
    %c0_i32_0 = arith.constant 0 : i32
    return %arg0, %c0_i32 : i32, i32
  }
}

</mosaic_0001>

<llo_original>
// kernel: lif_conv_bn_apply.1
$region0: #{lif_conv_bn_apply.1}
  #allocation0 [shape = 'u32[]', space=smem, size = 0x4, offset = 0x4, fixed_abs, tag = 'smem constant byte address 0x4 - core index']
  #allocation1 [shape = 'u32[144,128]{1,0:T(1,128)}', space=vmem, size = 0x12000, scoped, tag = 'internal scratch']
  %s0 = inlined_call_operand.vmem [shape: f32[32,64], index: 0, kind: input, shape index: {}]
  %s1 = inlined_call_operand.vmem [shape: bf16[192,128], index: 1, kind: input, shape index: {}]
  %s2 = inlined_call_operand.vmem [shape: f32[1,128], index: 2, kind: input, shape index: {}]
  %s3 = inlined_call_operand.vmem [shape: f32[32,128], index: 3, kind: output, shape index: {}]
  %s4 = sld [smem:[#allocation0]]
  $region22: #{lif_conv_bn_apply.1} parent=0
    _
  %s6 = ssub.s32 1, %s4
  %s7 = scalar_select 0, %s6, %s4
  // Predicated region
  $region2: #{lif_conv_bn_apply.1} parent=0 // pred_check
    _
  $region3: #{lif_conv_bn_apply.1} parent=0 // pred_check_branch
    %9 = sbr.rel (0) target = $region5
  $region4: #{lif_conv_bn_apply.1} parent=0 // pred_region
    _
  $region5: #{lif_conv_bn_apply.1} parent=0 // pred_fallthru
    _
  // Predicated region
  $region6: #{lif_conv_bn_apply.1} parent=0 // pred_check
    _
  $region7: #{lif_conv_bn_apply.1} parent=0 // pred_check_branch
    %11 = sbr.rel (0) target = $region9
  $region8: #{lif_conv_bn_apply.1} parent=0 // pred_region
    _
  $region9: #{lif_conv_bn_apply.1} parent=0 // pred_fallthru
    _
  // Predicated region
  $region10: #{lif_conv_bn_apply.1} parent=0 // pred_check
    _
  $region11: #{lif_conv_bn_apply.1} parent=0 // pred_check_branch
    %13 = sbr.rel (0) target = $region13
  $region12: #{lif_conv_bn_apply.1} parent=0 // pred_region
    _
  $region13: #{lif_conv_bn_apply.1} parent=0 // pred_fallthru
    _
  %v15 = vld [vmem:[%s0] sm:$0xff]
  %v16 = vld [vmem:[%s0 + $0x8] sm:$0xff]
  %v17 = vld [vmem:[%s0 + $0x10] sm:$0xff]
  %v18 = vld [vmem:[%s0 + $0x18] sm:$0xff]
  %vm19 = vcmp.ge.f32.partialorder %v15, 2.0
  %vm20 = vcmp.ge.f32.partialorder %v16, 2.0
  %vm21 = vcmp.ge.f32.partialorder %v17, 2.0
  %vm22 = vcmp.ge.f32.partialorder %v18, 2.0
  %v23 = vsel %vm19, 1, 0
  %v24 = vsel %vm20, 1, 0
  %v25 = vsel %vm21, 1, 0
  %v26 = vsel %vm22, 1, 0
  %v27 = vcvt.s32.f32 %v23
  %v28 = vcvt.s32.f32 %v24
  %v29 = vcvt.s32.f32 %v25
  %v30 = vcvt.s32.f32 %v26
  %v31 = vlaneseq
  %v32 = vshrl.u32 %v31, 7
  %v33 = vadd.s32 %v32, 8
  %v34 = vadd.s32 %v32, 16
  %v35 = vadd.s32 %v32, 24
  %vm36 = vcmp.lt.s32.totalorder %v32, 0
  %v37 = vsub.s32 0, %v32
  %v38 = vsel %vm36, %v37, %v32
  %v39 = vshrl.u32 %v38, 4
  %v40 = vand.u32 %v38, 15
  %v41 = vsub.s32 0, %v40
  %v42 = vsel %vm36, %v41, %v40
  %vm43 = vcmp.lt.s32.totalorder %v33, 0
  %v44 = vsub.s32 0, %v33
  %v45 = vsel %vm43, %v44, %v33
  %v46 = vshrl.u32 %v45, 4
  %v47 = vand.u32 %v45, 15
  %v48 = vsub.s32 0, %v47
  %v49 = vsel %vm43, %v48, %v47
  %vm50 = vcmp.lt.s32.totalorder %v34, 0
  %v51 = vsub.s32 0, %v34
  %v52 = vsel %vm50, %v51, %v34
  %v53 = vshrl.u32 %v52, 4
  %v54 = vand.u32 %v52, 15
  %v55 = vsub.s32 0, %v54
  %v56 = vsel %vm50, %v55, %v54
  %vm57 = vcmp.lt.s32.totalorder %v35, 0
  %v58 = vsub.s32 0, %v35
  %v59 = vsel %vm57, %v58, %v35
  %v60 = vshrl.u32 %v59, 4
  %v61 = vand.u32 %v59, 15
  %v62 = vsub.s32 0, %v61
  %v63 = vsel %vm57, %v62, %v61
  %vm64 = vcmp.ne.s32.totalorder %v42, 0
  %vm65 = vcmp.ne.s32.totalorder %v49, 0
  %vm66 = vcmp.ne.s32.totalorder %v56, 0
  %vm67 = vcmp.ne.s32.totalorder %v63, 0
  %vm68 = vcmp.lt.s32.totalorder %v42, 0
  %vm69 = vcmp.lt.s32.totalorder %v49, 0
  %vm70 = vcmp.lt.s32.totalorder %v56, 0
  %vm71 = vcmp.lt.s32.totalorder %v63, 0
  %vm72 = vmand %vm68, %vm64
  %vm73 = vmand %vm69, %vm65
  %vm74 = vmand %vm70, %vm66
  %vm75 = vmand %vm71, %vm67
  %v76 = vadd.s32 %v42, 16
  %v77 = vadd.s32 %v49, 16
  %v78 = vadd.s32 %v56, 16
  %v79 = vadd.s32 %v63, 16
  %v80 = vsel %vm72, %v76, %v42
  %v81 = vsel %vm73, %v77, %v49
  %v82 = vsel %vm74, %v78, %v56
  %v83 = vsel %vm75, %v79, %v63
  %v84 = vrot.slane %v27, 7
  %v85 = vrot.slane %v28, 7
  %v86 = vrot.slane %v29, 7
  %v87 = vrot.slane %v30, 7
  %vm88 = vcmp.lt.s32.totalorder %v32, 1
  %v89 = vsel %vm88, %v86, %v87
  %v90 = vsel %vm88, %v85, %v86
  %v91 = vsel %vm88, %v84, %v85
  %v92 = vsel %vm88, %v87, %v84
  %vm93 = vcmp.lt.s32.totalorder %v80, 1
  %vm94 = vcmp.lt.s32.totalorder %v81, 1
  %vm95 = vcmp.lt.s32.totalorder %v82, 1
  %vm96 = vcmp.lt.s32.totalorder %v83, 1
  %v97 = vsel %vm93, 0.0, %v92
  %v98 = vsel %vm94, 0.0, %v91
  %v99 = vsel %vm95, 0.0, %v90
  %v100 = vsel %vm96, 0.0, %v89
  %v101 = vrot.slane %v27, 1
  %v102 = vrot.slane %v28, 1
  %v103 = vrot.slane %v29, 1
  %v104 = vrot.slane %v30, 1
  %vm105 = vcmp.lt.s32.totalorder %v32, 7
  %v106 = vsel %vm105, %v103, %v104
  %v107 = vsel %vm105, %v102, %v103
  %v108 = vsel %vm105, %v101, %v102
  %v109 = vsel %vm105, %v104, %v101
  %vm110 = vcmp.ge.s32.totalorder %v80, 15
  %vm111 = vcmp.ge.s32.totalorder %v81, 15
  %vm112 = vcmp.ge.s32.totalorder %v82, 15
  %vm113 = vcmp.ge.s32.totalorder %v83, 15
  %v114 = vsel %vm110, 0.0, %v108
  %v115 = vsel %vm111, 0.0, %v107
  %v116 = vsel %vm112, 0.0, %v106
  %v117 = vsel %vm113, 0.0, %v109
  %122 = vrot.lane.b32.xlu0 %v27, 64
  %v123 = vpop.permute.xlu0 %122
  %124 = vrot.lane.b32.xlu0 %v28, 64
  %v125 = vpop.permute.xlu0 %124
  %126 = vrot.lane.b32.xlu0 %v29, 64
  %v127 = vpop.permute.xlu0 %126
  %128 = vrot.lane.b32.xlu0 %v30, 64
  %v129 = vpop.permute.xlu0 %128
  %vm134 = vcmask 523264
  %v135 = vsel %vm134, %v97, %v123
  %v136 = vsel %vm134, %v98, %v125
  %v137 = vsel %vm134, %v99, %v127
  %v138 = vsel %vm134, %v100, %v129
  %v139 = vpack.c.bf16 %v136, %v135
  %v140 = vpack.c.bf16 %v115, %v114
  %v141 = vpack.c.bf16 %v138, %v137
  %v142 = vpack.c.bf16 %v117, %v116
  %v143 = vld [vmem:[%s1] sm:$0xf]
  %v144 = vld [vmem:[%s1 + $0x4] sm:$0xf]
  %v145 = vld [vmem:[%s1 + $0x8] sm:$0xf]
  %v146 = vld [vmem:[%s1 + $0xc] sm:$0xf]
  %v147 = vld [vmem:[%s1 + $0x10] sm:$0xf]
  %v148 = vld [vmem:[%s1 + $0x14] sm:$0xf]
  %v149 = vld [vmem:[%s1 + $0x18] sm:$0xf]
  %v150 = vld [vmem:[%s1 + $0x1c] sm:$0xf]
  %v151 = vld [vmem:[%s1 + $0x20] sm:$0xf]
  %v152 = vld [vmem:[%s1 + $0x24] sm:$0xf]
  %v153 = vld [vmem:[%s1 + $0x28] sm:$0xf]
  %v154 = vld [vmem:[%s1 + $0x2c] sm:$0xf]
  %v155 = vld [vmem:[%s1 + $0x30] sm:$0xf]
  %v156 = vld [vmem:[%s1 + $0x34] sm:$0xf]
  %v157 = vld [vmem:[%s1 + $0x38] sm:$0xf]
  %v158 = vld [vmem:[%s1 + $0x3c] sm:$0xf]
  %v159 = vld [vmem:[%s1 + $0x40] sm:$0xf]
  %v160 = vld [vmem:[%s1 + $0x44] sm:$0xf]
  %v161 = vld [vmem:[%s1 + $0x48] sm:$0xf]
  %v162 = vld [vmem:[%s1 + $0x4c] sm:$0xf]
  %v163 = vld [vmem:[%s1 + $0x50] sm:$0xf]
  %v164 = vld [vmem:[%s1 + $0x54] sm:$0xf]
  %v165 = vld [vmem:[%s1 + $0x58] sm:$0xf]
  %v166 = vld [vmem:[%s1 + $0x5c] sm:$0xf]
  %v167 = vld [vmem:[%s2] sm:$0x1]
  %v169 = vlaneseq
  %v170 = vshrl.u32 %v169, 7
  %v171 = vsub.s32 0, %v170
  %v172 = vrot.slane %v167, %v171
  %v198 = vunpack.c.l.b16 %v143
  %v199 = vunpack.c.l.b16 %v144
  %v200 = vunpack.c.l.b16 %v145
  %v201 = vunpack.c.l.b16 %v146
  %v202 = vunpack.c.l.b16 %v147
  %v203 = vunpack.c.l.b16 %v148
  %v204 = vunpack.c.l.b16 %v149
  %v205 = vunpack.c.l.b16 %v150
  %v206 = vunpack.c.l.b16 %v151
  %v207 = vunpack.c.l.b16 %v152
  %v208 = vunpack.c.l.b16 %v153
  %v209 = vunpack.c.l.b16 %v154
  %v210 = vunpack.c.l.b16 %v155
  %v211 = vunpack.c.l.b16 %v156
  %v212 = vunpack.c.l.b16 %v157
  %v213 = vunpack.c.l.b16 %v158
  %v214 = vunpack.c.l.b16 %v159
  %v215 = vunpack.c.l.b16 %v160
  %v216 = vunpack.c.l.b16 %v161
  %v217 = vunpack.c.l.b16 %v162
  %v218 = vunpack.c.l.b16 %v163
  %v219 = vunpack.c.l.b16 %v164
  %v220 = vunpack.c.l.b16 %v165
  %v221 = vunpack.c.l.b16 %v166
  %v222 = vpack.c.b16 %v199, %v198
  %v223 = vpack.c.b16 %v201, %v200
  %v224 = vpack.c.b16 %v203, %v202
  %v225 = vpack.c.b16 %v205, %v204
  %v226 = vpack.c.b16 %v207, %v206
  %v227 = vpack.c.b16 %v209, %v208
  %v228 = vpack.c.b16 %v211, %v210
  %v229 = vpack.c.b16 %v213, %v212
  %v230 = vpack.c.b16 %v215, %v214
  %v231 = vpack.c.b16 %v217, %v216
  %v232 = vpack.c.b16 %v219, %v218
  %v233 = vpack.c.b16 %v221, %v220
  %v247 = vsel %vm134, %v140, 0
  %v250 = vsel %vm134, %v142, 0
  %252 = vmatprep.subr.bf16.mxu0 0
  %253 = vmatpush1.bf16.msra.mxu0 %v229
  %254 = vmatprep.subr.bf16.mxu0 0
  %255 = vmatpush1.bf16.msra.mxu0 %v228
  %256 = vmatprep.subr.bf16.mxu0 0
  %257 = vmatpush1.bf16.msra.mxu0 %v227
  %258 = vmatprep.subr.bf16.mxu0 0
  %259 = vmatpush1.bf16.msra.mxu0 %v226
  %260 = vmatprep.subr.bf16.mxu0 0
  %261 = vmatpush1.bf16.msra.mxu0 %v225
  %262 = vmatprep.subr.bf16.mxu0 0
  %263 = vmatpush1.bf16.msra.mxu0 %v224
  %264 = vmatprep.subr.bf16.mxu0 0
  %265 = vmatpush1.bf16.msra.mxu0 %v223
  %266 = vmatprep.subr.bf16.mxu0 0
  %267 = vmatpush1.bf16.msra.mxu0 %v222
  %268 = vmatprep.subr.bf16.mxu0 0
  %269 = vmatpush2.bf16.msra.mxu0 0
  %270 = vmatprep.subr.bf16.mxu0 0
  %271 = vmatpush2.bf16.msra.mxu0 0
  %272 = vmatprep.subr.bf16.mxu0 0
  %273 = vmatpush2.bf16.msra.mxu0 0
  %274 = vmatprep.subr.bf16.mxu0 0
  %275 = vmatpush2.bf16.msra.mxu0 0
  %276 = vmatprep.subr.bf16.mxu0 0
  %277 = vmatpush2.bf16.msra.mxu0 %v233
  %278 = vmatprep.subr.bf16.mxu0 0
  %279 = vmatpush2.bf16.msra.mxu0 %v232
  %280 = vmatprep.subr.bf16.mxu0 0
  %281 = vmatpush2.bf16.msra.mxu0 %v231
  %282 = vmatprep.subr.bf16.mxu0 0
  %283 = vmatpush2.bf16.msra.mxu0 %v230
  %284 = vmatprep.mubr.bf16.mxu0 %v247
  %285 = vmatmul.mubr.bf16.gmra.mxu0 %v139
  %v286 = vpop.f32.mrf.mxu0
  %v287 = vadd.f32 %v172, %v286
  %v288 = vpop.f32.mrf.mxu0
  %v289 = vpop.f32.mrf.mxu0
  %v290 = vadd.f32 %v172, %v289
  %v291 = vpop.f32.mrf.mxu0
  %292 = vmatprep.mubr.bf16.mxu0 %v250
  %293 = vmatmul.mubr.bf16.gmra.mxu0 %v141
  %v294 = vpop.f32.mrf.mxu0
  %v295 = vadd.f32 %v172, %v294
  %v296 = vpop.f32.mrf.mxu0
  %v297 = vpop.f32.mrf.mxu0
  %v298 = vadd.f32 %v172, %v297
  %v299 = vpop.f32.mrf.mxu0
  %300 = vdwg.mxu0
  %301 = vst [vmem:[%s3] sm:$0xff] %v287
  %302 = vst [vmem:[%s3 + $0x8] sm:$0xff] %v290
  %303 = vst [vmem:[%s3 + $0x10] sm:$0xff] %v295
  %304 = vst [vmem:[%s3 + $0x18] sm:$0xff] %v298
  // Predicated region
  $region14: #{lif_conv_bn_apply.1} parent=0 // pred_check
    _
  $region15: #{lif_conv_bn_apply.1} parent=0 // pred_check_branch
    %306 = sbr.rel (0) target = $region17
  $region16: #{lif_conv_bn_apply.1} parent=0 // pred_region
    _
  $region17: #{lif_conv_bn_apply.1} parent=0 // pred_fallthru
    _
  // Predicated region
  $region18: #{lif_conv_bn_apply.1} parent=0 // pred_check
    _
  $region19: #{lif_conv_bn_apply.1} parent=0 // pred_check_branch
    %308 = sbr.rel (0) target = $region21
  $region20: #{lif_conv_bn_apply.1} parent=0 // pred_region
    _
  $region21: #{lif_conv_bn_apply.1} parent=0 // pred_fallthru
    _

</llo_original>
